<compile_context>
chip_gen: v7x
topology: tpu7x:2x2x1
jax: 0.10.0
libtpu: 0.0.40
codegen_flags: <defaults>
</compile_context>

<pallas_src>
import jax
import jax.numpy as jnp
from jax.experimental import pallas as pl
from jax.experimental.pallas import tpu as pltpu

_LANE = 128
_BLOCK_ROWS = 4096                      # (4096, 128) f32 block = 2 MiB / buffer
_SMALL_LIMIT_BYTES = 256 * 1024         # below this: single full-array block, no grid
_VMEM_LIMIT_BYTES = 32 * 1024 * 1024    # safe on v5e/v6e/v7x; >> 8 MiB working set


def _sine_kernel(x_ref, o_ref):
    # Elementwise hot path on the whole VMEM tile (VPU range-reduction + poly).
    x = x_ref[...]
    if x.dtype != jnp.float32:
        x = x.astype(jnp.float32)       # keep the fast f32 VALU path (v5e)
    o_ref[...] = jnp.sin(x).astype(o_ref.dtype)


def sine_act(x: jax.Array) -> jax.Array:
    """Elementwise sin(x), matching torch.sin semantics (same shape & dtype)."""
    orig_shape = x.shape
    orig_dtype = x.dtype
    n = x.size
    if n == 0:
        return x
    itemsize = jnp.dtype(orig_dtype).itemsize

    flat = x.reshape(-1)

    # Pad only to a lane multiple (128) so the slab reshapes to a lane-dense
    # (rows, 128) layout.  No block-multiple padding: the ragged edge grid
    # block is handled by Pallas with masked stores, and sin on the stale
    # values in the padded remainder of the last input block is benign
    # (those rows are never written back).
    n_lane = pl.cdiv(n, _LANE) * _LANE
    padded = n_lane != n
    if padded:
        flat = jnp.pad(flat, (0, n_lane - n))
    rows = n_lane // _LANE
    x2 = flat.reshape(rows, _LANE)

    cost = pl.CostEstimate(
        flops=8 * n,                     # range reduction + polynomial, ~few/elem
        transcendentals=n,
        bytes_accessed=2 * n * itemsize,
    )

    if n * itemsize <= _SMALL_LIMIT_BYTES:
        # ---- Small path: one lane-dense block, no grid, no pipeline overhead. ----
        out2 = pl.pallas_call(
            _sine_kernel,
            out_shape=jax.ShapeDtypeStruct((rows, _LANE), orig_dtype),
            cost_estimate=cost,
        )(x2)
    else:
        # ---- Large path: pipelined (4096, 128) tiles, ragged edge masked. ----
        grid = (pl.cdiv(rows, _BLOCK_ROWS),)
        out2 = pl.pallas_call(
            _sine_kernel,
            out_shape=jax.ShapeDtypeStruct((rows, _LANE), orig_dtype),
            grid_spec=pltpu.PrefetchScalarGridSpec(
                num_scalar_prefetch=0,
                grid=grid,
                in_specs=[pl.BlockSpec((_BLOCK_ROWS, _LANE), lambda i: (i, 0))],
                out_specs=pl.BlockSpec((_BLOCK_ROWS, _LANE), lambda i: (i, 0)),
            ),
            compiler_params=pltpu.CompilerParams(
                dimension_semantics=("parallel",),
                vmem_limit_bytes=_VMEM_LIMIT_BYTES,
            ),
            cost_estimate=cost,
        )(x2)

    if padded:
        return out2.reshape(-1)[:n].reshape(orig_shape)
    return out2.reshape(orig_shape)


if __name__ == "__main__":
    key = jax.random.PRNGKey(0)

    # Primary test: NCHW activation (N=2, C=4, H=16, W=16) as in the module spec.
    x = jax.random.normal(key, (2, 4, 16, 16), dtype=jnp.float32)
    y = sine_act(x)
    jax.block_until_ready(y)
    y_ref = jnp.sin(x)
    assert y.shape == x.shape and y.dtype == x.dtype
    assert jnp.allclose(y, y_ref, atol=1e-6, rtol=1e-6)

    # Padding path: size not a multiple of 128.
    k1, k2 = jax.random.split(key)
    x_odd = jax.random.normal(k1, (3, 5, 7), dtype=jnp.float32)
    y_odd = sine_act(x_odd)
    jax.block_until_ready(y_odd)
    assert jnp.allclose(y_odd, jnp.sin(x_odd), atol=1e-6, rtol=1e-6)

    # Large pipelined path with a ragged edge block:
    # 3*500*512 = 768000 elems (~2.9 MiB) -> rows=6000, grid=cdiv(6000,4096)=2,
    # second block masked; 128-aligned so the wrapper is copy-free.
    x_big = jax.random.normal(k2, (3, 500, 512), dtype=jnp.float32)
    y_big = sine_act(x_big)
    jax.block_until_ready(y_big)
    assert jnp.allclose(y_big, jnp.sin(x_big), atol=1e-6, rtol=1e-6)

    print("KERNEL_OK")
</pallas_src>

<mosaic_0001>
module attributes {stable_mosaic.version = 11 : i64} {
  func.func @_sine_kernel(%arg0: memref<16x128xf32, #tpu.memory_space<vmem>>, %arg1: memref<16x128xf32, #tpu.memory_space<vmem>>) attributes {dimension_semantics = [], scalar_prefetch = 0 : i64, scratch_operands = 0 : i64, tpu.core_type = #tpu.core_type<tc>} {
    %c0 = arith.constant 0 : index
    %c0_0 = arith.constant 0 : index
    %0 = vector.load %arg0[%c0, %c0_0] : memref<16x128xf32, #tpu.memory_space<vmem>>, vector<16x128xf32>
    %1 = math.sin %0 : vector<16x128xf32>
    %c0_1 = arith.constant 0 : index
    %c0_2 = arith.constant 0 : index
    %2 = vector.load %arg1[%c0_1, %c0_2] : memref<16x128xf32, #tpu.memory_space<vmem>>, vector<16x128xf32>
    tpu.vector_store %arg1[%c0_1, %c0_2], %1 {strides = array<i32>} : memref<16x128xf32, #tpu.memory_space<vmem>>, vector<16x128xf32>,
    return
  }
}

</mosaic_0001>

<llo_original>
// kernel: tpu_custom_call.1
$region0: #{tpu_custom_call.1}
  #allocation0 [shape = 'u32[]', space=smem, size = 0x4, offset = 0x4, fixed_abs, tag = 'smem constant byte address 0x4 - core index']
  #allocation1 [shape = 'u32[144,128]{1,0:T(1,128)}', space=vmem, size = 0x12000, scoped, tag = 'internal scratch']
  %s0 = inlined_call_operand.hbm [shape: f32[16,128], index: 0, kind: input, shape index: {}]
  %s1 = inlined_call_operand.hbm [shape: f32[16,128], index: 1, kind: output, shape index: {}]
  %s2 = sld [smem:[#allocation0]]
  $region18: #{tpu_custom_call.1} parent=0
    _
  %s4 = ssub.s32 1, %s2
  %s5 = scalar_select 0, %s4, %s2
  $region1: #{tpu_custom_call.1} parent=0
    #allocation2 [shape = 'u8[8192]{0}', space=vmem, size = 0x2000, scoped, tag = 'input window, operand 0, single buffered']
    #allocation3 [shape = 's32[1]{0}', space=sflag, size = 0x4, scoped, tag = 'scoped memory for tpu_custom_call.1']
    #allocation4 [shape = 's32[1]{0}', space=sflag, size = 0x4, scoped, tag = 'scoped memory for tpu_custom_call.1']
    #allocation5 [shape = 'u8[8192]{0}', space=vmem, size = 0x2000, scoped, tag = 'output window, operand 0, single buffered']
    %6 = vsyncpa [#allocation3], 0
    %7 = vsyncpa [#allocation4], 0
    // Predicated region
    $region2: #{tpu_custom_call.1} parent=1 // pred_check
      _
    $region3: #{tpu_custom_call.1} parent=1 // pred_check_branch
      %9 = sbr.rel (0) target = $region5
    $region4: #{tpu_custom_call.1} parent=1 // pred_region
      %s11 = ssub.s32 256, 256
      %12 = vsyncadd [#allocation3], %s11
      %s13 = sshll.u32 [#allocation2], 4
      %s14 = int_to_ptr.vmem [resolvable:$true] %s13
      %19 = dma.hbm_to_vmem [thread:$0]  %s0, 256, %s14, [#allocation3], 128, 128, 8
    $region5: #{tpu_custom_call.1} parent=1 // pred_fallthru
      _
    // Predicated region
    $region6: #{tpu_custom_call.1} parent=1 // pred_check
      _
    $region7: #{tpu_custom_call.1} parent=1 // pred_check_branch
      %21 = sbr.rel (0) target = $region9
    $region8: #{tpu_custom_call.1} parent=1 // pred_region
      %22 = dma.done [#allocation3], 256
    $region9: #{tpu_custom_call.1} parent=1 // pred_fallthru
      _
    %v23 = vld [vmem:[#allocation2] sm:$0xff]
    %v24 = vld [vmem:[#allocation2 + $0x8] sm:$0xff]
    %v25 = vand.u32 2147483647, %v23
    %vm26 = vcmp.le.f32.partialorder %v25, 0.7853982
    %vm27 = vcmp.lt.s32.totalorder %v23, 0
    %v28 = vand.u32 %v23, 2139095040
    %v29 = vshrl.u32 %v28, 23
    %v30 = vsub.s32 %v29, 127
    %v31 = vand.u32 2147483647, %v23
    %v32 = vand.u32 %v31, 8388607
    %v33 = vor.u32 %v32, 8388608
    %v34 = vsub.s32 0, %v33
    %v35 = vadd.s32 %v30, 1
    %vm36 = vcmp.gt.s32.totalorder %v35, 0
    %v37 = vsel %vm36, %v35, 0
    %v38 = vshrl.u32 %v37, 5
    %v39 = vand.u32 %v37, 31
    %v40 = vsub.s32 32, %v39
    %v41 = vshrl.u32 683565275, %v40
    %v42 = vshll.u32 683565275, %v39
    %v43 = vshrl.u32 2475754826, %v40
    %v44 = vor.u32 %v42, %v43
    %v45 = vshll.u32 2475754826, %v39
    %v46 = vshrl.u32 2131351028, %v40
    %v47 = vor.u32 %v45, %v46
    %v48 = vshll.u32 2131351028, %v39
    %v49 = vshrl.u32 2102212464, %v40
    %v50 = vor.u32 %v48, %v49
    %v51 = vshll.u32 2102212464, %v39
    %v52 = vshrl.u32 920167782, %v40
    %v53 = vor.u32 %v51, %v52
    %v54 = vshll.u32 920167782, %v39
    %v55 = vshrl.u32 1326507024, %v40
    %v56 = vor.u32 %v54, %v55
    %vm57 = vcmp.lt.s32.totalorder %v38, 1
    %vm58 = vcmp.lt.s32.totalorder %v38, 2
    %vm59 = vcmp.lt.s32.totalorder %v38, 3
    %vm60 = vcmp.lt.s32.totalorder %v38, 4
    %v61 = vsel %vm57, %v41, %v44
    %v62 = vsel %vm60, %v50, 2102212464
    %v63 = vsel %vm59, %v47, %v62
    %v64 = vsel %vm58, %v61, %v63
    %v65 = vsel %vm57, %v44, %v47
    %v66 = vsel %vm60, %v53, 920167782
    %v67 = vsel %vm59, %v50, %v66
    %v68 = vsel %vm58, %v65, %v67
    %v69 = vsel %vm57, %v47, %v50
    %v70 = vsel %vm60, %v56, 1326507024
    %v71 = vsel %vm59, %v53, %v70
    %v72 = vsel %vm58, %v69, %v71
    %v73 = vshll.u32 %v33, 8
    %v74 = vmul.u32.u64.compose %v73, %v72
    %v75 = vextract.low.u32 %v74
    %v76 = vextract.high.u32 %v74
    %v77 = vmul.u32.u64.compose %v73, %v68
    %v78 = vextract.low.u32 %v77
    %v79 = vextract.high.u32 %v77
    %v80 = vmul.u32 %v73, %v64
    %v81 = vadd.s32 %v76, %v78
    %vm82 = vc.u32 %v76, %v78
    %v83 = vadd.s32 %v79, 1
    %v84 = vsel %vm82, %v83, %v79
    %v85 = vadd.s32 %v80, %v84
    %v86 = vadd.s32 %v85, 536870912
    %v87 = vshrl.u32 %v86, 30
    %v88 = vshll.u32 %v87, 30
    %v89 = vsub.s32 %v85, %v88
    %vm90 = vcmp.lt.s32.totalorder %v89, 0
    %v91 = vsub.s32 0, %v89
    %v92 = vsel %vm90, %v91, %v89
    %v93 = vclz %v92
    %v94 = vsub.s32 %v93, 2
    %vm95 = vcmp.gt.s32.totalorder 0, %v94
    %v96 = vsel %vm95, 0, %v94
    %v97 = vsub.s32 32, %v96
    %v98 = vshll.u32 %v89, %v96
    %v99 = vshrl.u32 %v81, %v97
    %v100 = vor.u32 %v98, %v99
    %v101 = vsub.s32 4294967266, %v96
    %v102 = vadd.s32 %v101, 127
    %v103 = vshll.u32 %v102, 23
    %v104 = vor.u32 4788187, %v103
    %v105 = vand.u32 2147483647, %v104
    %v107 = vcvt.s32.f32 %v100
    %v108 = vmul.f32 %v107, %v105
    %v109 = vxor.u32 %v108, 2147483648
    %v110 = vsel %vm27, %v109, %v108
    %v111 = vsub.s32 4, %v87
    %v112 = vsel %vm27, %v111, %v87
    %v113 = vsel %vm26, %v23, %v110
    %v114 = vsel %vm26, 0, %v112
    %v115 = vcosq.f32.pop %v113
    %v116 = vsinq.f32.pop %v113
    %vm117 = vweird.f32 %v23
    %v118 = vadd.s32 %v114, 3
    %v119 = vand.u32 %v118, 3
    %vm120 = vcmp.lt.s32.totalorder %v119, 2
    %vm121 = vcmp.eq.s32.totalorder %v119, 0
    %v122 = vxor.u32 %v116, 2147483648
    %v123 = vsel %vm121, %v115, %v122
    %vm124 = vcmp.eq.s32.totalorder %v119, 2
    %v125 = vxor.u32 %v115, 2147483648
    %v126 = vsel %vm124, %v125, %v116
    %v127 = vsel %vm120, %v123, %v126
    %v128 = vsel %vm117, nan, %v127
    %v129 = vand.u32 2147483647, %v24
    %vm130 = vcmp.le.f32.partialorder %v129, 0.7853982
    %vm131 = vcmp.lt.s32.totalorder %v24, 0
    %v132 = vand.u32 %v24, 2139095040
    %v133 = vshrl.u32 %v132, 23
    %v134 = vsub.s32 %v133, 127
    %v135 = vand.u32 2147483647, %v24
    %v136 = vand.u32 %v135, 8388607
    %v137 = vor.u32 %v136, 8388608
    %v138 = vsub.s32 0, %v137
    %v139 = vadd.s32 %v134, 1
    %vm140 = vcmp.gt.s32.totalorder %v139, 0
    %v141 = vsel %vm140, %v139, 0
    %v142 = vshrl.u32 %v141, 5
    %v143 = vand.u32 %v141, 31
    %v144 = vsub.s32 32, %v143
    %v145 = vshrl.u32 683565275, %v144
    %v146 = vshll.u32 683565275, %v143
    %v147 = vshrl.u32 2475754826, %v144
    %v148 = vor.u32 %v146, %v147
    %v149 = vshll.u32 2475754826, %v143
    %v150 = vshrl.u32 2131351028, %v144
    %v151 = vor.u32 %v149, %v150
    %v152 = vshll.u32 2131351028, %v143
    %v153 = vshrl.u32 2102212464, %v144
    %v154 = vor.u32 %v152, %v153
    %v155 = vshll.u32 2102212464, %v143
    %v156 = vshrl.u32 920167782, %v144
    %v157 = vor.u32 %v155, %v156
    %v158 = vshll.u32 920167782, %v143
    %v159 = vshrl.u32 1326507024, %v144
    %v160 = vor.u32 %v158, %v159
    %vm161 = vcmp.lt.s32.totalorder %v142, 1
    %vm162 = vcmp.lt.s32.totalorder %v142, 2
    %vm163 = vcmp.lt.s32.totalorder %v142, 3
    %vm164 = vcmp.lt.s32.totalorder %v142, 4
    %v165 = vsel %vm161, %v145, %v148
    %v166 = vsel %vm164, %v154, 2102212464
    %v167 = vsel %vm163, %v151, %v166
    %v168 = vsel %vm162, %v165, %v167
    %v169 = vsel %vm161, %v148, %v151
    %v170 = vsel %vm164, %v157, 920167782
    %v171 = vsel %vm163, %v154, %v170
    %v172 = vsel %vm162, %v169, %v171
    %v173 = vsel %vm161, %v151, %v154
    %v174 = vsel %vm164, %v160, 1326507024
    %v175 = vsel %vm163, %v157, %v174
    %v176 = vsel %vm162, %v173, %v175
    %v177 = vshll.u32 %v137, 8
    %v178 = vmul.u32.u64.compose %v177, %v176
    %v179 = vextract.low.u32 %v178
    %v180 = vextract.high.u32 %v178
    %v181 = vmul.u32.u64.compose %v177, %v172
    %v182 = vextract.low.u32 %v181
    %v183 = vextract.high.u32 %v181
    %v184 = vmul.u32 %v177, %v168
    %v185 = vadd.s32 %v180, %v182
    %vm186 = vc.u32 %v180, %v182
    %v187 = vadd.s32 %v183, 1
    %v188 = vsel %vm186, %v187, %v183
    %v189 = vadd.s32 %v184, %v188
    %v190 = vadd.s32 %v189, 536870912
    %v191 = vshrl.u32 %v190, 30
    %v192 = vshll.u32 %v191, 30
    %v193 = vsub.s32 %v189, %v192
    %vm194 = vcmp.lt.s32.totalorder %v193, 0
    %v195 = vsub.s32 0, %v193
    %v196 = vsel %vm194, %v195, %v193
    %v197 = vclz %v196
    %v198 = vsub.s32 %v197, 2
    %vm199 = vcmp.gt.s32.totalorder 0, %v198
    %v200 = vsel %vm199, 0, %v198
    %v201 = vsub.s32 32, %v200
    %v202 = vshll.u32 %v193, %v200
    %v203 = vshrl.u32 %v185, %v201
    %v204 = vor.u32 %v202, %v203
    %v205 = vsub.s32 4294967266, %v200
    %v206 = vadd.s32 %v205, 127
    %v207 = vshll.u32 %v206, 23
    %v208 = vor.u32 4788187, %v207
    %v209 = vand.u32 2147483647, %v208
    %v211 = vcvt.s32.f32 %v204
    %v212 = vmul.f32 %v211, %v209
    %v213 = vxor.u32 %v212, 2147483648
    %v214 = vsel %vm131, %v213, %v212
    %v215 = vsub.s32 4, %v191
    %v216 = vsel %vm131, %v215, %v191
    %v217 = vsel %vm130, %v24, %v214
    %v218 = vsel %vm130, 0, %v216
    %v219 = vcosq.f32.pop %v217
    %v220 = vsinq.f32.pop %v217
    %vm221 = vweird.f32 %v24
    %v222 = vadd.s32 %v218, 3
    %v223 = vand.u32 %v222, 3
    %vm224 = vcmp.lt.s32.totalorder %v223, 2
    %vm225 = vcmp.eq.s32.totalorder %v223, 0
    %v226 = vxor.u32 %v220, 2147483648
    %v227 = vsel %vm225, %v219, %v226
    %vm228 = vcmp.eq.s32.totalorder %v223, 2
    %v229 = vxor.u32 %v219, 2147483648
    %v230 = vsel %vm228, %v229, %v220
    %v231 = vsel %vm224, %v227, %v230
    %v232 = vsel %vm221, nan, %v231
    %233 = vst [vmem:[#allocation5] sm:$0xff] %v128
    %234 = vst [vmem:[#allocation5 + $0x8] sm:$0xff] %v232
    // Predicated region
    $region10: #{tpu_custom_call.1} parent=1 // pred_check
      _
    $region11: #{tpu_custom_call.1} parent=1 // pred_check_branch
      %236 = sbr.rel (0) target = $region13
    $region12: #{tpu_custom_call.1} parent=1 // pred_region
      %s238 = ssub.s32 256, 256
      %239 = vsyncadd [#allocation4], %s238
      %s240 = sshll.u32 [#allocation5], 4
      %s241 = int_to_ptr.vmem [resolvable:$true] %s240
      %246 = dma.vmem_to_hbm [thread:$0]  %s241, 256, %s1, [#allocation4], 128, 128, 8
    $region13: #{tpu_custom_call.1} parent=1 // pred_fallthru
      _
    // Predicated region
    $region14: #{tpu_custom_call.1} parent=1 // pred_check
      _
    $region15: #{tpu_custom_call.1} parent=1 // pred_check_branch
      %248 = sbr.rel (0) target = $region17
    $region16: #{tpu_custom_call.1} parent=1 // pred_region
      %249 = dma.done [#allocation4], 256
    $region17: #{tpu_custom_call.1} parent=1 // pred_fallthru
      _
    %250 = vsyncpa [#allocation3], 1
    %251 = vsyncpa [#allocation4], 1

</llo_original>
